<compile_context>
chip_gen: v6e
topology: v6e:2x2x1
jax: 0.10.0
libtpu: 0.0.40
codegen_flags: <defaults>
</compile_context>

<pallas_src>
import numpy as np
import jax
import jax.numpy as jnp
from jax.experimental import pallas as pl
from jax.experimental.pallas import tpu as pltpu

LANE = 128


def _big_vmem_part():
    try:
        kind = jax.devices()[0].device_kind.lower()
    except Exception:
        return False
    return any(tag in kind for tag in ("v4", "v5", "v6"))


_BIG_VMEM = _big_vmem_part()
VMEM_LIMIT = (96 if _BIG_VMEM else 48) * 1024 * 1024
TT_MAX = 64 if _BIG_VMEM else 32
ROW_TILE = 1024 if _BIG_VMEM else 512


# ----------------------------------------------------------------------------
# Pallas kernels
# ----------------------------------------------------------------------------
def proj1_kernel(x_ref, w_ref, b_ref, o_ref):
    """o = x @ w + b   (row-tiled fused-direction GEMM)."""
    o_ref[...] = (jnp.dot(x_ref[...], w_ref[...],
                          preferred_element_type=jnp.float32)
                  + b_ref[...])


def proj2_kernel(xa_ref, xb_ref, wa_ref, wb_ref, b_ref, o_ref):
    """o = xa @ wa + xb @ wb + b (consumes fwd/bwd halves without a concat)."""
    o_ref[...] = (jnp.dot(xa_ref[...], wa_ref[...],
                          preferred_element_type=jnp.float32)
                  + jnp.dot(xb_ref[...], wb_ref[...],
                            preferred_element_type=jnp.float32)
                  + b_ref[...])


def bigru_kernel(xpf_ref, xpb_ref, len_ref, whf_ref, whb_ref, bnf_ref, bnb_ref,
                 outf_ref, outb_ref, hf_scr, hb_scr):
    """Fused bidirectional GRU recurrence over one time chunk.

    xpf_ref / xpb_ref : (tt, B, 3H') views into the same fused projection
        tensor; xpb blocks arrive in reverse chunk order (backward direction).
        xp already contains x@W_i + b_i + b_hr|b_hz folded (gate order r|z|n).
    len_ref : (B, 1) int32 sequence lengths (constant block).
    wh*_ref : (H', 3H') fused hidden weights; bn*_ref : (1, H') b_hn only.
    out*    : (tt, B, H') per-direction outputs (bwd written at reversed t).
    h*_scr  : (B, H') VMEM scratch carrying hidden state across chunks.
    """
    tt, bsz, g3 = xpf_ref.shape
    h = g3 // 3
    c = pl.program_id(0)
    nc = pl.num_programs(0)

    @pl.when(c == 0)
    def _():
        hf_scr[...] = jnp.zeros_like(hf_scr)
        hb_scr[...] = jnp.zeros_like(hb_scr)

    # Broadcast lengths to (B, H') once per chunk (outside the serial loop).
    lens = jnp.broadcast_to(len_ref[...], (bsz, h))      # int32
    bnf = bnf_ref[...]
    bnb = bnb_ref[...]
    t0_f = c * tt
    t0_b = (nc - 1 - c) * tt

    def step(i, carry):
        hf, hb = carry
        rt = tt - 1 - i

        # ---- forward direction: global time t0_f + i ----
        xf = xpf_ref[i]                                  # (B, 3H')
        hhf = jnp.dot(hf, whf_ref[...], preferred_element_type=jnp.float32)
        rf = jax.nn.sigmoid(xf[:, :h] + hhf[:, :h])
        zf = jax.nn.sigmoid(xf[:, h:2 * h] + hhf[:, h:2 * h])
        nf = jnp.tanh(xf[:, 2 * h:] + rf * (hhf[:, 2 * h:] + bnf))
        hf_new = nf + zf * (hf - nf)
        valid_f = (t0_f + i) < lens                      # (B, H') bool
        hf = jnp.where(valid_f, hf_new, hf)
        outf_ref[i] = jnp.where(valid_f, hf_new, 0.0)

        # ---- backward direction: global time t0_b + rt (descending) ----
        xb = xpb_ref[rt]
        hhb = jnp.dot(hb, whb_ref[...], preferred_element_type=jnp.float32)
        rb = jax.nn.sigmoid(xb[:, :h] + hhb[:, :h])
        zb = jax.nn.sigmoid(xb[:, h:2 * h] + hhb[:, h:2 * h])
        nb = jnp.tanh(xb[:, 2 * h:] + rb * (hhb[:, 2 * h:] + bnb))
        hb_new = nb + zb * (hb - nb)
        valid_b = (t0_b + rt) < lens
        hb = jnp.where(valid_b, hb_new, hb)
        outb_ref[rt] = jnp.where(valid_b, hb_new, 0.0)

        return (hf, hb)

    hf_fin, hb_fin = jax.lax.fori_loop(0, tt, step,
                                       (hf_scr[...], hb_scr[...]),
                                       unroll=True)
    hf_scr[...] = hf_fin
    hb_scr[...] = hb_fin


# ----------------------------------------------------------------------------
# pallas_call wrappers
# ----------------------------------------------------------------------------
def _row_tiled_matmul(kernel, xs, ws, b, out_dim):
    n = xs[0].shape[0]
    tm = n if n <= ROW_TILE else ROW_TILE
    grid = (pl.cdiv(n, tm),)
    in_specs = ([pl.BlockSpec((tm, x.shape[1]), lambda i: (i, 0)) for x in xs]
                + [pl.BlockSpec(w.shape, lambda i: (0, 0)) for w in ws]
                + [pl.BlockSpec(b.shape, lambda i: (0, 0))])
    return pl.pallas_call(
        kernel,
        out_shape=jax.ShapeDtypeStruct((n, out_dim), jnp.float32),
        grid=grid,
        in_specs=in_specs,
        out_specs=pl.BlockSpec((tm, out_dim), lambda i: (i, 0)),
        compiler_params=pltpu.CompilerParams(
            dimension_semantics=("parallel",),
            vmem_limit_bytes=VMEM_LIMIT),
    )(*xs, *ws, b)


def linear1(x, w, b):
    return _row_tiled_matmul(proj1_kernel, [x], [w], b, w.shape[1])


def linear2(xa, xb, wa, wb, b):
    return _row_tiled_matmul(proj2_kernel, [xa, xb], [wa, wb], b, wa.shape[1])


def bigru_layer(xp, lens, wh_f, wh_b, bn_f, bn_b, tt, hp):
    """Fused bidirectional recurrence over the whole (padded) sequence."""
    tp, bsz, g6 = xp.shape
    g3 = g6 // 2
    nc = tp // tt

    in_specs = [
        pl.BlockSpec((tt, bsz, g3), lambda c: (c, 0, 0)),           # xp fwd half
        pl.BlockSpec((tt, bsz, g3), lambda c: (nc - 1 - c, 0, 1)),  # xp bwd half (rev)
        pl.BlockSpec((bsz, 1), lambda c: (0, 0)),                   # lengths
        pl.BlockSpec((hp, g3), lambda c: (0, 0)),                   # Wh fwd
        pl.BlockSpec((hp, g3), lambda c: (0, 0)),                   # Wh bwd
        pl.BlockSpec((1, hp), lambda c: (0, 0)),                    # b_hn fwd
        pl.BlockSpec((1, hp), lambda c: (0, 0)),                    # b_hn bwd
    ]
    out_specs = [
        pl.BlockSpec((tt, bsz, hp), lambda c: (c, 0, 0)),           # out fwd
        pl.BlockSpec((tt, bsz, hp), lambda c: (nc - 1 - c, 0, 0)),  # out bwd
    ]
    return pl.pallas_call(
        bigru_kernel,
        out_shape=(jax.ShapeDtypeStruct((tp, bsz, hp), jnp.float32),
                   jax.ShapeDtypeStruct((tp, bsz, hp), jnp.float32)),
        grid=(nc,),
        in_specs=in_specs,
        out_specs=out_specs,
        scratch_shapes=[pltpu.VMEM((bsz, hp), jnp.float32),
                        pltpu.VMEM((bsz, hp), jnp.float32)],
        compiler_params=pltpu.CompilerParams(
            dimension_semantics=("arbitrary",),          # serial recurrence
            vmem_limit_bytes=VMEM_LIMIT),
    )(xp, xp, lens, wh_f, wh_b, bn_f, bn_b)


# ----------------------------------------------------------------------------
# Parameter preparation (PyTorch layout -> fused, lane-padded Pallas layout)
# ----------------------------------------------------------------------------
def _round_up(x, m):
    return ((x + m - 1) // m) * m


def _gate_pad_cols(w, h, hp):
    """Pad each of the 3 gate blocks (r|z|n) along the last axis from h to hp."""
    if hp == h:
        return w
    pad = [(0, 0)] * (w.ndim - 1) + [(0, hp - h)]
    return jnp.concatenate([jnp.pad(w[..., :h], pad),
                            jnp.pad(w[..., h:2 * h], pad),
                            jnp.pad(w[..., 2 * h:], pad)], axis=-1)


def _pad_rows(w, rp):
    return jnp.pad(w, ((0, rp - w.shape[0]),) + ((0, 0),) * (w.ndim - 1))


def prepare_params(raw, hidden_dim, output_dim):
    h = hidden_dim // 2
    hp = _round_up(h, LANE)
    layers = []
    for li, lr in enumerate(raw["layers"]):
        entry = {}
        wi_parts, wia_parts, wib_parts, bi_parts = [], [], [], []
        for d in ("fwd", "bwd"):
            p = lr[d]
            # Fold b_hr, b_hz into the input bias; only b_hn stays in the cell.
            bi = p["b_ih"] + p["b_hh"].at[2 * h:].set(0.0)
            bn = p["b_hh"][2 * h:]
            wh = _pad_rows(_gate_pad_cols(p["w_hh"].T, h, hp), hp)   # (hp, 3hp)
            entry[d] = dict(wh=wh, bn=jnp.pad(bn, (0, hp - h)).reshape(1, hp))
            bi_parts.append(_gate_pad_cols(bi.reshape(1, 3 * h), h, hp))
            wi = _gate_pad_cols(p["w_ih"].T, h, hp)                  # (din, 3hp)
            if li == 0:
                wi_parts.append(wi)
            else:                              # input is [out_f | out_b] (2h)
                wia_parts.append(_pad_rows(wi[:h], hp))              # (hp, 3hp)
                wib_parts.append(_pad_rows(wi[h:], hp))
        entry["bi"] = jnp.concatenate(bi_parts, axis=-1)             # (1, 6hp)
        if li == 0:
            entry["wi"] = jnp.concatenate(wi_parts, axis=-1)         # (din, 6hp)
        else:
            entry["wia"] = jnp.concatenate(wia_parts, axis=-1)       # (hp, 6hp)
            entry["wib"] = jnp.concatenate(wib_parts, axis=-1)
        layers.append(entry)

    op = _round_up(output_dim, LANE)
    fc_w = jnp.pad(raw["fc_w"].T, ((0, 0), (0, op - output_dim)))    # (2h, op)
    fc_b = jnp.pad(raw["fc_b"], (0, op - output_dim)).reshape(1, op)
    return dict(layers=layers,
                fc_wa=_pad_rows(fc_w[:h], hp), fc_wb=_pad_rows(fc_w[h:], hp),
                fc_b=fc_b, h=h, hp=hp, op=op, output_dim=output_dim)


# ----------------------------------------------------------------------------
# Model glue (padding / packed-sequence emulation)
# ----------------------------------------------------------------------------
def _pick_tt(t, bsz, hp):
    # per-chunk VMEM, double-buffered: 2 xp blocks + 2 out blocks (f32)
    bytes_per_step = 2 * (2 * bsz * 3 * hp + 2 * bsz * hp) * 4
    budget = VMEM_LIMIT // 2
    tt = max(1, min(TT_MAX, budget // max(bytes_per_step, 1)))
    return min(t, tt)


def bigru_crf_forward(x_btd, seq_lengths, params, num_layers):
    seq_lengths_np = np.asarray(seq_lengths)
    t_max = int(seq_lengths_np.max())            # pad_packed_sequence length

    x = jnp.transpose(x_btd.astype(jnp.float32), (1, 0, 2))   # (T, B, Din)
    t, b, din = x.shape
    hp = params["hp"]
    g6 = 6 * hp

    tt = _pick_tt(t, _round_up(b, 8), hp)
    tp = _round_up(t, tt)                        # pad T to a chunk multiple
    bp = _round_up(b, 8)                         # pad B to sublane multiple
    x = jnp.pad(x, ((0, tp - t), (0, bp - b), (0, 0)))

    lens = jnp.zeros((bp, 1), jnp.int32).at[:b, 0].set(
        jnp.asarray(seq_lengths_np, jnp.int32))

    out_f = out_b = None
    for layer in range(num_layers):
        lp = params["layers"][layer]
        if layer == 0:
            flat = x.reshape(tp * bp, din)
            xp = linear1(flat, lp["wi"], lp["bi"]).reshape(tp, bp, g6)
        else:
            ff = out_f.reshape(tp * bp, hp)
            fb = out_b.reshape(tp * bp, hp)
            xp = linear2(ff, fb, lp["wia"], lp["wib"],
                         lp["bi"]).reshape(tp, bp, g6)
        out_f, out_b = bigru_layer(xp, lens,
                                   lp["fwd"]["wh"], lp["bwd"]["wh"],
                                   lp["fwd"]["bn"], lp["bwd"]["bn"], tt, hp)

    # Final fc over [fwd | bwd] halves (no concat), output padded to 128 lanes.
    ff = out_f[:t_max].reshape(t_max * bp, hp)
    fb = out_b[:t_max].reshape(t_max * bp, hp)
    em = linear2(ff, fb, params["fc_wa"], params["fc_wb"], params["fc_b"])
    em = em.reshape(t_max, bp, -1)[:, :b, :params["output_dim"]]
    return jnp.transpose(em, (1, 0, 2))          # (B, t_max, output_dim)


# ----------------------------------------------------------------------------
# Deterministic PyTorch-style init (uniform(-1/sqrt(H), 1/sqrt(H)), gates r|z|n)
# ----------------------------------------------------------------------------
def init_params(key, input_dim, hidden_dim, output_dim, num_layers):
    h = hidden_dim // 2
    k_gru = 1.0 / np.sqrt(h)
    layers = []
    for layer in range(num_layers):
        din = input_dim if layer == 0 else hidden_dim
        dirs = {}
        for d in ("fwd", "bwd"):
            key, k1, k2, k3, k4 = jax.random.split(key, 5)
            dirs[d] = dict(
                w_ih=jax.random.uniform(k1, (3 * h, din), jnp.float32, -k_gru, k_gru),
                w_hh=jax.random.uniform(k2, (3 * h, h), jnp.float32, -k_gru, k_gru),
                b_ih=jax.random.uniform(k3, (3 * h,), jnp.float32, -k_gru, k_gru),
                b_hh=jax.random.uniform(k4, (3 * h,), jnp.float32, -k_gru, k_gru),
            )
        layers.append(dirs)
    key, kw, kb = jax.random.split(key, 3)
    k_fc = 1.0 / np.sqrt(hidden_dim)
    fc_w = jax.random.uniform(kw, (output_dim, hidden_dim), jnp.float32, -k_fc, k_fc)
    fc_b = jax.random.uniform(kb, (output_dim,), jnp.float32, -k_fc, k_fc)
    return dict(layers=layers, fc_w=fc_w, fc_b=fc_b)


# ----------------------------------------------------------------------------
if __name__ == "__main__":
    B, T = 2, 8
    input_dim, hidden_dim, tag_size, output_dim, num_layers = 16, 32, 6, 8, 2

    key = jax.random.PRNGKey(0)
    kx, kp = jax.random.split(key)
    x = jax.random.normal(kx, (B, T, input_dim), jnp.float32)   # batch-first
    seq_lengths = np.array([8, 5], dtype=np.int32)              # max length == T

    raw = init_params(kp, input_dim, hidden_dim, output_dim, num_layers)
    params = prepare_params(raw, hidden_dim, output_dim)

    emissions = bigru_crf_forward(x, seq_lengths, params, num_layers)
    emissions = jax.block_until_ready(emissions)

    assert emissions.shape == (B, int(seq_lengths.max()), output_dim)
    assert emissions.dtype == jnp.float32
    assert bool(jnp.all(jnp.isfinite(emissions)))
    print("KERNEL_OK")
</pallas_src>

<mosaic_0001>
module attributes {stable_mosaic.version = 11 : i64} {
  func.func @proj1_kernel(%arg0: i32, %arg1: memref<64x16xf32, #tpu.memory_space<vmem>>, %arg2: memref<16x768xf32, #tpu.memory_space<vmem>>, %arg3: memref<1x768xf32, #tpu.memory_space<vmem>>, %arg4: memref<64x768xf32, #tpu.memory_space<vmem>>) attributes {dimension_semantics = [#tpu.dimension_semantics<parallel>], iteration_bounds = array<i64: 1>, scalar_prefetch = 0 : i64, scratch_operands = 0 : i64, tpu.core_type = #tpu.core_type<tc>, window_params = [{transform_indices = @transform_0, window_bounds = array<i64: 64, 16>}, {pipeline_mode = #tpu.pipeline_mode<synchronous>, transform_indices = @transform_1, window_bounds = array<i64: 16, 768>}, {pipeline_mode = #tpu.pipeline_mode<synchronous>, transform_indices = @transform_2, window_bounds = array<i64: 1, 768>}, {transform_indices = @transform_3, window_bounds = array<i64: 64, 768>}]} {
    %c0 = arith.constant 0 : index
    %c0_0 = arith.constant 0 : index
    %0 = vector.load %arg1[%c0, %c0_0] : memref<64x16xf32, #tpu.memory_space<vmem>>, vector<64x16xf32>
    %c0_1 = arith.constant 0 : index
    %c0_2 = arith.constant 0 : index
    %1 = vector.load %arg2[%c0_1, %c0_2] : memref<16x768xf32, #tpu.memory_space<vmem>>, vector<16x768xf32>
    %cst = arith.constant dense<0.000000e+00> : vector<64x768xf32>
    %2 = tpu.matmul %0, %1, %cst {dimension_numbers = #tpu.dot_dimension_numbers<[1], [0], [0], [1], [0, 0, 1, 1], [], []>} : vector<64x16xf32>, vector<16x768xf32>, vector<64x768xf32> -> vector<64x768xf32>
    %c0_3 = arith.constant 0 : index
    %c0_4 = arith.constant 0 : index
    %3 = vector.load %arg3[%c0_3, %c0_4] : memref<1x768xf32, #tpu.memory_space<vmem>>, vector<1x768xf32>
    %4 = vector.broadcast %3 : vector<1x768xf32> to vector<64x768xf32>
    %5 = arith.addf %2, %4 : vector<64x768xf32>
    %c0_5 = arith.constant 0 : index
    %c0_6 = arith.constant 0 : index
    %6 = vector.load %arg4[%c0_5, %c0_6] : memref<64x768xf32, #tpu.memory_space<vmem>>, vector<64x768xf32>
    tpu.vector_store %arg4[%c0_5, %c0_6], %5 {strides = array<i32>} : memref<64x768xf32, #tpu.memory_space<vmem>>, vector<64x768xf32>,
    return
  }
  func.func @transform_0(%arg0: i32) -> (i32, i32) {
    %c0_i32 = arith.constant 0 : i32
    %c0_i32_0 = arith.constant 0 : i32
    return %arg0, %c0_i32 : i32, i32
  }
  func.func @transform_1(%arg0: i32) -> (i32, i32) {
    %c0_i32 = arith.constant 0 : i32
    %c0_i32_0 = arith.constant 0 : i32
    %c0_i32_1 = arith.constant 0 : i32
    return %c0_i32, %c0_i32_0 : i32, i32
  }
  func.func @transform_2(%arg0: i32) -> (i32, i32) {
    %c0_i32 = arith.constant 0 : i32
    %c0_i32_0 = arith.constant 0 : i32
    %c0_i32_1 = arith.constant 0 : i32
    return %c0_i32, %c0_i32_0 : i32, i32
  }
  func.func @transform_3(%arg0: i32) -> (i32, i32) {
    %c0_i32 = arith.constant 0 : i32
    %c0_i32_0 = arith.constant 0 : i32
    return %arg0, %c0_i32 : i32, i32
  }
}

</mosaic_0001>

<llo_original>
// kernel: tpu_custom_call.1
$region0: #{tpu_custom_call.1}
  #allocation0 [shape = 'u32[]', space=smem, size = 0x4, offset = 0x4, fixed_abs, tag = 'smem constant byte address 0x4 - core index']
  #allocation1 [shape = 'u32[144,128]{1,0:T(1,128)}', space=vmem, size = 0x12000, scoped, tag = 'internal scratch']
  %s0 = inlined_call_operand.vmem [shape: f32[64,16], index: 0, kind: input, shape index: {}]
  %s1 = inlined_call_operand.hbm [shape: f32[16,768], index: 1, kind: input, shape index: {}]
  %s2 = inlined_call_operand.vmem [shape: f32[1,768], index: 2, kind: input, shape index: {}]
  %s3 = inlined_call_operand.hbm [shape: f32[64,768], index: 3, kind: output, shape index: {}]
  %s4 = sld [smem:[#allocation0]]
  $region26: #{tpu_custom_call.1} parent=0
    _
  %s6 = ssub.s32 1, %s4
  %s7 = scalar_select 0, %s6, %s4
  $region1: #{tpu_custom_call.1} parent=0
    #allocation2 [shape = 'u8[49152]{0}', space=vmem, size = 0xc000, scoped, tag = 'input window, operand 1, single buffered']
    #allocation3 [shape = 's32[1]{0}', space=sflag, size = 0x4, scoped, tag = 'scoped memory for tpu_custom_call.1']
    #allocation4 [shape = 's32[1]{0}', space=sflag, size = 0x4, scoped, tag = 'scoped memory for tpu_custom_call.1']
    #allocation5 [shape = 'u8[196608]{0}', space=vmem, size = 0x30000, scoped, tag = 'output window, operand 0, single buffered']
    %8 = vsyncpa [#allocation3], 0
    %9 = vsyncpa [#allocation4], 0
    // Predicated region
    $region2: #{tpu_custom_call.1} parent=1 // pred_check
      _
    $region3: #{tpu_custom_call.1} parent=1 // pred_check_branch
      %11 = sbr.rel (0) target = $region5
    $region4: #{tpu_custom_call.1} parent=1 // pred_region
      _
    $region5: #{tpu_custom_call.1} parent=1 // pred_fallthru
      _
    // Predicated region
    $region6: #{tpu_custom_call.1} parent=1 // pred_check
      _
    $region7: #{tpu_custom_call.1} parent=1 // pred_check_branch
      %13 = sbr.rel (0) target = $region9
    $region8: #{tpu_custom_call.1} parent=1 // pred_region
      %s15 = ssub.s32 1536, 1536
      %16 = vsyncadd [#allocation3], %s15
      %s17 = sshll.u32 [#allocation2], 4
      %s18 = int_to_ptr.vmem [resolvable:$true] %s17
      %23 = dma.hbm_to_vmem [thread:$0]  %s1, 1536, %s18, [#allocation3], 768, 768, 48
    $region9: #{tpu_custom_call.1} parent=1 // pred_fallthru
      _
    // Predicated region
    $region10: #{tpu_custom_call.1} parent=1 // pred_check
      _
    $region11: #{tpu_custom_call.1} parent=1 // pred_check_branch
      %25 = sbr.rel (0) target = $region13
    $region12: #{tpu_custom_call.1} parent=1 // pred_region
      _
    $region13: #{tpu_custom_call.1} parent=1 // pred_fallthru
      _
    // Predicated region
    $region14: #{tpu_custom_call.1} parent=1 // pred_check
      _
    $region15: #{tpu_custom_call.1} parent=1 // pred_check_branch
      %27 = sbr.rel (0) target = $region17
    $region16: #{tpu_custom_call.1} parent=1 // pred_region
      %28 = dma.done [#allocation3], 1536
    $region17: #{tpu_custom_call.1} parent=1 // pred_fallthru
      _
    %v29 = vld [vmem:[%s0] sm:$0xff]
    %v30 = vld [vmem:[%s0 + $0x8] sm:$0xff]
    %v31 = vld [vmem:[%s0 + $0x10] sm:$0xff]
    %v32 = vld [vmem:[%s0 + $0x18] sm:$0xff]
    %v33 = vld [vmem:[%s0 + $0x20] sm:$0xff]
    %v34 = vld [vmem:[%s0 + $0x28] sm:$0xff]
    %v35 = vld [vmem:[%s0 + $0x30] sm:$0xff]
    %v36 = vld [vmem:[%s0 + $0x38] sm:$0xff]
    %v37 = vld [vmem:[#allocation2] sm:$0xff]
    %v38 = vld [vmem:[#allocation2 + $0x8] sm:$0xff]
    %v39 = vld [vmem:[#allocation2 + $0x10] sm:$0xff]
    %v40 = vld [vmem:[#allocation2 + $0x18] sm:$0xff]
    %v41 = vld [vmem:[#allocation2 + $0x20] sm:$0xff]
    %v42 = vld [vmem:[#allocation2 + $0x28] sm:$0xff]
    %v43 = vld [vmem:[#allocation2 + $0x30] sm:$0xff]
    %v44 = vld [vmem:[#allocation2 + $0x38] sm:$0xff]
    %v45 = vld [vmem:[#allocation2 + $0x40] sm:$0xff]
    %v46 = vld [vmem:[#allocation2 + $0x48] sm:$0xff]
    %v47 = vld [vmem:[#allocation2 + $0x50] sm:$0xff]
    %v48 = vld [vmem:[#allocation2 + $0x58] sm:$0xff]
    %v49 = vld [vmem:[%s2] sm:$0x3f]
    %v51 = vlaneseq
    %v52 = vshrl.u32 %v51, 7
    %v53 = vsub.s32 0, %v52
    %v54 = vrot.slane %v49, %v53
    %v55 = vlaneseq
    %v56 = vshrl.u32 %v55, 7
    %v57 = vsub.s32 1, %v56
    %v58 = vrot.slane %v49, %v57
    %v59 = vlaneseq
    %v60 = vshrl.u32 %v59, 7
    %v61 = vsub.s32 2, %v60
    %v62 = vrot.slane %v49, %v61
    %v63 = vlaneseq
    %v64 = vshrl.u32 %v63, 7
    %v65 = vsub.s32 3, %v64
    %v66 = vrot.slane %v49, %v65
    %v67 = vlaneseq
    %v68 = vshrl.u32 %v67, 7
    %v69 = vsub.s32 4, %v68
    %v70 = vrot.slane %v49, %v69
    %v71 = vlaneseq
    %v72 = vshrl.u32 %v71, 7
    %v73 = vsub.s32 5, %v72
    %v74 = vrot.slane %v49, %v73
    %vm81 = vcmask 130048
    %v83 = vsel %vm81, %v29, 0
    %v86 = vsel %vm81, %v30, 0
    %v89 = vsel %vm81, %v31, 0
    %v92 = vsel %vm81, %v32, 0
    %v95 = vsel %vm81, %v33, 0
    %v98 = vsel %vm81, %v34, 0
    %v101 = vsel %vm81, %v35, 0
    %v104 = vsel %vm81, %v36, 0
    %106 = vmatprep.subr.mxu0 0.0
    %107 = vmatpush1.msra.mxu0 0.0
    %108 = vmatprep.subr.mxu0 0.0
    %109 = vmatpush1.msra.mxu0 0.0
    %110 = vmatprep.subr.mxu0 0.0
    %111 = vmatpush1.msra.mxu0 0.0
    %112 = vmatprep.subr.mxu0 0.0
    %113 = vmatpush1.msra.mxu0 0.0
    %114 = vmatprep.subr.mxu0 0.0
    %115 = vmatpush1.msra.mxu0 0.0
    %116 = vmatprep.subr.mxu0 0.0
    %117 = vmatpush1.msra.mxu0 0.0
    %118 = vmatprep.subr.mxu0 0.0
    %119 = vmatpush1.msra.mxu0 0.0
    %120 = vmatprep.subr.mxu0 0.0
    %121 = vmatpush1.msra.mxu0 0.0
    %122 = vmatprep.subr.mxu0 0.0
    %123 = vmatpush1.msra.mxu0 0.0
    %124 = vmatprep.subr.mxu0 0.0
    %125 = vmatpush1.msra.mxu0 0.0
    %126 = vmatprep.subr.mxu0 0.0
    %127 = vmatpush1.msra.mxu0 0.0
    %128 = vmatprep.subr.mxu0 0.0
    %129 = vmatpush1.msra.mxu0 0.0
    %130 = vmatprep.subr.mxu0 0.0
    %131 = vmatpush1.msra.mxu0 0.0
    %132 = vmatprep.subr.mxu0 0.0
    %133 = vmatpush1.msra.mxu0 0.0
    %134 = vmatprep.subr.mxu0 %v44
    %135 = vmatpush1.msra.mxu0 %v43
    %136 = vmatprep.subr.mxu0 %v38
    %137 = vmatpush1.msra.mxu0 %v37
    %138 = vmatprep.subr.mxu0 0.0
    %139 = vmatpush2.msra.mxu0 0.0
    %140 = vmatprep.subr.mxu0 0.0
    %141 = vmatpush2.msra.mxu0 0.0
    %142 = vmatprep.subr.mxu0 0.0
    %143 = vmatpush2.msra.mxu0 0.0
    %144 = vmatprep.subr.mxu0 0.0
    %145 = vmatpush2.msra.mxu0 0.0
    %146 = vmatprep.subr.mxu0 0.0
    %147 = vmatpush2.msra.mxu0 0.0
    %148 = vmatprep.subr.mxu0 0.0
    %149 = vmatpush2.msra.mxu0 0.0
    %150 = vmatprep.subr.mxu0 0.0
    %151 = vmatpush2.msra.mxu0 0.0
    %152 = vmatprep.subr.mxu0 0.0
    %153 = vmatpush2.msra.mxu0 0.0
    %154 = vmatprep.subr.mxu0 0.0
    %155 = vmatpush2.msra.mxu0 0.0
    %156 = vmatprep.subr.mxu0 0.0
    %157 = vmatpush2.msra.mxu0 0.0
    %158 = vmatprep.subr.mxu0 0.0
    %159 = vmatpush2.msra.mxu0 0.0
    %160 = vmatprep.subr.mxu0 0.0
    %161 = vmatpush2.msra.mxu0 0.0
    %162 = vmatprep.subr.mxu0 0.0
    %163 = vmatpush2.msra.mxu0 0.0
    %164 = vmatprep.subr.mxu0 0.0
    %165 = vmatpush2.msra.mxu0 0.0
    %166 = vmatprep.subr.mxu0 0.0
    %167 = vmatpush2.msra.mxu0 0.0
    %168 = vmatprep.subr.mxu0 0.0
    %169 = vmatpush2.msra.mxu0 0.0
    %170 = vmatprep.mubr.f32.mxu0 0.0
    %171 = vmatmul.mubr.f32.gmra.mxu0 %v83
    %v172 = vpop.f32.mrf.mxu0
    %v173 = vadd.f32 %v54, %v172
    %v174 = vpop.f32.mrf.mxu0
    %v175 = vadd.f32 %v58, %v174
    %176 = vmatprep.mubr.f32.mxu0 0.0
    %177 = vmatmul.mubr.f32.gmra.mxu0 %v86
    %v178 = vpop.f32.mrf.mxu0
    %v179 = vadd.f32 %v54, %v178
    %v180 = vpop.f32.mrf.mxu0
    %v181 = vadd.f32 %v58, %v180
    %182 = vmatprep.mubr.f32.mxu0 0.0
    %183 = vmatmul.mubr.f32.gmra.mxu0 %v89
    %v184 = vpop.f32.mrf.mxu0
    %v185 = vadd.f32 %v54, %v184
    %v186 = vpop.f32.mrf.mxu0
    %v187 = vadd.f32 %v58, %v186
    %188 = vmatprep.mubr.f32.mxu0 0.0
    %189 = vmatmul.mubr.f32.gmra.mxu0 %v92
    %v190 = vpop.f32.mrf.mxu0
    %v191 = vadd.f32 %v54, %v190
    %v192 = vpop.f32.mrf.mxu0
    %v193 = vadd.f32 %v58, %v192
    %194 = vmatprep.mubr.f32.mxu0 0.0
    %195 = vmatmul.mubr.f32.gmra.mxu0 %v95
    %v196 = vpop.f32.mrf.mxu0
    %v197 = vadd.f32 %v54, %v196
    %v198 = vpop.f32.mrf.mxu0
    %v199 = vadd.f32 %v58, %v198
    %200 = vmatprep.mubr.f32.mxu0 0.0
    %201 = vmatmul.mubr.f32.gmra.mxu0 %v98
    %v202 = vpop.f32.mrf.mxu0
    %v203 = vadd.f32 %v54, %v202
    %v204 = vpop.f32.mrf.mxu0
    %v205 = vadd.f32 %v58, %v204
    %206 = vmatprep.mubr.f32.mxu0 0.0
    %207 = vmatmul.mubr.f32.gmra.mxu0 %v101
    %v208 = vpop.f32.mrf.mxu0
    %v209 = vadd.f32 %v54, %v208
    %v210 = vpop.f32.mrf.mxu0
    %v211 = vadd.f32 %v58, %v210
    %212 = vmatprep.mubr.f32.mxu0 0.0
    %213 = vmatmul.mubr.f32.gmra.mxu0 %v104
    %v214 = vpop.f32.mrf.mxu0
    %v215 = vadd.f32 %v54, %v214
    %v216 = vpop.f32.mrf.mxu0
    %v217 = vadd.f32 %v58, %v216
    %218 = vdwg.mxu0
    %219 = vmatprep.subr.mxu0 0.0
    %220 = vmatpush1.msra.mxu0 0.0
    %221 = vmatprep.subr.mxu0 0.0
    %222 = vmatpush1.msra.mxu0 0.0
    %223 = vmatprep.subr.mxu0 0.0
    %224 = vmatpush1.msra.mxu0 0.0
    %225 = vmatprep.subr.mxu0 0.0
    %226 = vmatpush1.msra.mxu0 0.0
    %227 = vmatprep.subr.mxu0 0.0
    %228 = vmatpush1.msra.mxu0 0.0
    %229 = vmatprep.subr.mxu0 0.0
    %230 = vmatpush1.msra.mxu0 0.0
    %231 = vmatprep.subr.mxu0 0.0
    %232 = vmatpush1.msra.mxu0 0.0
    %233 = vmatprep.subr.mxu0 0.0
    %234 = vmatpush1.msra.mxu0 0.0
    %235 = vmatprep.subr.mxu0 0.0
    %236 = vmatpush1.msra.mxu0 0.0
    %237 = vmatprep.subr.mxu0 0.0
    %238 = vmatpush1.msra.mxu0 0.0
    %239 = vmatprep.subr.mxu0 0.0
    %240 = vmatpush1.msra.mxu0 0.0
    %241 = vmatprep.subr.mxu0 0.0
    %242 = vmatpush1.msra.mxu0 0.0
    %243 = vmatprep.subr.mxu0 0.0
    %244 = vmatpush1.msra.mxu0 0.0
    %245 = vmatprep.subr.mxu0 0.0
    %246 = vmatpush1.msra.mxu0 0.0
    %247 = vmatprep.subr.mxu0 %v46
    %248 = vmatpush1.msra.mxu0 %v45
    %249 = vmatprep.subr.mxu0 %v40
    %250 = vmatpush1.msra.mxu0 %v39
    %251 = vmatprep.subr.mxu0 0.0
    %252 = vmatpush2.msra.mxu0 0.0
    %253 = vmatprep.subr.mxu0 0.0
    %254 = vmatpush2.msra.mxu0 0.0
    %255 = vmatprep.subr.mxu0 0.0
    %256 = vmatpush2.msra.mxu0 0.0
    %257 = vmatprep.subr.mxu0 0.0
    %258 = vmatpush2.msra.mxu0 0.0
    %259 = vmatprep.subr.mxu0 0.0
    %260 = vmatpush2.msra.mxu0 0.0
    %261 = vmatprep.subr.mxu0 0.0
    %262 = vmatpush2.msra.mxu0 0.0
    %263 = vmatprep.subr.mxu0 0.0
    %264 = vmatpush2.msra.mxu0 0.0
    %265 = vmatprep.subr.mxu0 0.0
    %266 = vmatpush2.msra.mxu0 0.0
    %267 = vmatprep.subr.mxu0 0.0
    %268 = vmatpush2.msra.mxu0 0.0
    %269 = vmatprep.subr.mxu0 0.0
    %270 = vmatpush2.msra.mxu0 0.0
    %271 = vmatprep.subr.mxu0 0.0
    %272 = vmatpush2.msra.mxu0 0.0
    %273 = vmatprep.subr.mxu0 0.0
    %274 = vmatpush2.msra.mxu0 0.0
    %275 = vmatprep.subr.mxu0 0.0
    %276 = vmatpush2.msra.mxu0 0.0
    %277 = vmatprep.subr.mxu0 0.0
    %278 = vmatpush2.msra.mxu0 0.0
    %279 = vmatprep.subr.mxu0 0.0
    %280 = vmatpush2.msra.mxu0 0.0
    %281 = vmatprep.subr.mxu0 0.0
    %282 = vmatpush2.msra.mxu0 0.0
    %283 = vmatprep.mubr.f32.mxu0 0.0
    %284 = vmatmul.mubr.f32.gmra.mxu0 %v83
    %v285 = vpop.f32.mrf.mxu0
    %v286 = vadd.f32 %v62, %v285
    %v287 = vpop.f32.mrf.mxu0
    %v288 = vadd.f32 %v66, %v287
    %289 = vmatprep.mubr.f32.mxu0 0.0
    %290 = vmatmul.mubr.f32.gmra.mxu0 %v86
    %v291 = vpop.f32.mrf.mxu0
    %v292 = vadd.f32 %v62, %v291
    %v293 = vpop.f32.mrf.mxu0
    %v294 = vadd.f32 %v66, %v293
    %295 = vmatprep.mubr.f32.mxu0 0.0
    %296 = vmatmul.mubr.f32.gmra.mxu0 %v89
    %v297 = vpop.f32.mrf.mxu0
    %v298 = vadd.f32 %v62, %v297
    %v299 = vpop.f32.mrf.mxu0
    %v300 = vadd.f32 %v66, %v299
    %301 = vmatprep.mubr.f32.mxu0 0.0
    %302 = vmatmul.mubr.f32.gmra.mxu0 %v92
    %v303 = vpop.f32.mrf.mxu0
    %v304 = vadd.f32 %v62, %v303
    %v305 = vpop.f32.mrf.mxu0
    %v306 = vadd.f32 %v66, %v305
    %307 = vmatprep.mubr.f32.mxu0 0.0
    %308 = vmatmul.mubr.f32.gmra.mxu0 %v95
    %v309 = vpop.f32.mrf.mxu0
    %v310 = vadd.f32 %v62, %v309
    %v311 = vpop.f32.mrf.mxu0
    %v312 = vadd.f32 %v66, %v311
    %313 = vmatprep.mubr.f32.mxu0 0.0
    %314 = vmatmul.mubr.f32.gmra.mxu0 %v98
    %v315 = vpop.f32.mrf.mxu0
    %v316 = vadd.f32 %v62, %v315
    %v317 = vpop.f32.mrf.mxu0
    %v318 = vadd.f32 %v66, %v317
    %319 = vmatprep.mubr.f32.mxu0 0.0
    %320 = vmatmul.mubr.f32.gmra.mxu0 %v101
    %v321 = vpop.f32.mrf.mxu0
    %v322 = vadd.f32 %v62, %v321
    %v323 = vpop.f32.mrf.mxu0
    %v324 = vadd.f32 %v66, %v323
    %325 = vmatprep.mubr.f32.mxu0 0.0
    %326 = vmatmul.mubr.f32.gmra.mxu0 %v104
    %v327 = vpop.f32.mrf.mxu0
    %v328 = vadd.f32 %v62, %v327
    %v329 = vpop.f32.mrf.mxu0
    %v330 = vadd.f32 %v66, %v329
    %331 = vdwg.mxu0
    %332 = vmatprep.subr.mxu0 0.0
    %333 = vmatpush1.msra.mxu0 0.0
    %334 = vmatprep.subr.mxu0 0.0
    %335 = vmatpush1.msra.mxu0 0.0
    %336 = vmatprep.subr.mxu0 0.0
    %337 = vmatpush1.msra.mxu0 0.0
    %338 = vmatprep.subr.mxu0 0.0
    %339 = vmatpush1.msra.mxu0 0.0
    %340 = vmatprep.subr.mxu0 0.0
    %341 = vmatpush1.msra.mxu0 0.0
    %342 = vmatprep.subr.mxu0 0.0
    %343 = vmatpush1.msra.mxu0 0.0
    %344 = vmatprep.subr.mxu0 0.0
    %345 = vmatpush1.msra.mxu0 0.0
    %346 = vmatprep.subr.mxu0 0.0
    %347 = vmatpush1.msra.mxu0 0.0
    %348 = vmatprep.subr.mxu0 0.0
    %349 = vmatpush1.msra.mxu0 0.0
    %350 = vmatprep.subr.mxu0 0.0
    %351 = vmatpush1.msra.mxu0 0.0
    %352 = vmatprep.subr.mxu0 0.0
    %353 = vmatpush1.msra.mxu0 0.0
    %354 = vmatprep.subr.mxu0 0.0
    %355 = vmatpush1.msra.mxu0 0.0
    %356 = vmatprep.subr.mxu0 0.0
    %357 = vmatpush1.msra.mxu0 0.0
    %358 = vmatprep.subr.mxu0 0.0
    %359 = vmatpush1.msra.mxu0 0.0
    %360 = vmatprep.subr.mxu0 %v48
    %361 = vmatpush1.msra.mxu0 %v47
    %362 = vmatprep.subr.mxu0 %v42
    %363 = vmatpush1.msra.mxu0 %v41
    %364 = vmatprep.subr.mxu0 0.0
    %365 = vmatpush2.msra.mxu0 0.0
    %366 = vmatprep.subr.mxu0 0.0
    %367 = vmatpush2.msra.mxu0 0.0
    %368 = vmatprep.subr.mxu0 0.0
    %369 = vmatpush2.msra.mxu0 0.0
    %370 = vmatprep.subr.mxu0 0.0
    %371 = vmatpush2.msra.mxu0 0.0
    %372 = vmatprep.subr.mxu0 0.0
    %373 = vmatpush2.msra.mxu0 0.0
    %374 = vmatprep.subr.mxu0 0.0
    %375 = vmatpush2.msra.mxu0 0.0
    %376 = vmatprep.subr.mxu0 0.0
    %377 = vmatpush2.msra.mxu0 0.0
    %378 = vmatprep.subr.mxu0 0.0
    %379 = vmatpush2.msra.mxu0 0.0
    %380 = vmatprep.subr.mxu0 0.0
    %381 = vmatpush2.msra.mxu0 0.0
    %382 = vmatprep.subr.mxu0 0.0
    %383 = vmatpush2.msra.mxu0 0.0
    %384 = vmatprep.subr.mxu0 0.0
    %385 = vmatpush2.msra.mxu0 0.0
    %386 = vmatprep.subr.mxu0 0.0
    %387 = vmatpush2.msra.mxu0 0.0
    %388 = vmatprep.subr.mxu0 0.0
    %389 = vmatpush2.msra.mxu0 0.0
    %390 = vmatprep.subr.mxu0 0.0
    %391 = vmatpush2.msra.mxu0 0.0
    %392 = vmatprep.subr.mxu0 0.0
    %393 = vmatpush2.msra.mxu0 0.0
    %394 = vmatprep.subr.mxu0 0.0
    %395 = vmatpush2.msra.mxu0 0.0
    %396 = vmatprep.mubr.f32.mxu0 0.0
    %397 = vmatmul.mubr.f32.gmra.mxu0 %v83
    %v398 = vpop.f32.mrf.mxu0
    %v399 = vadd.f32 %v70, %v398
    %v400 = vpop.f32.mrf.mxu0
    %v401 = vadd.f32 %v74, %v400
    %402 = vmatprep.mubr.f32.mxu0 0.0
    %403 = vmatmul.mubr.f32.gmra.mxu0 %v86
    %v404 = vpop.f32.mrf.mxu0
    %v405 = vadd.f32 %v70, %v404
    %v406 = vpop.f32.mrf.mxu0
    %v407 = vadd.f32 %v74, %v406
    %408 = vmatprep.mubr.f32.mxu0 0.0
    %409 = vmatmul.mubr.f32.gmra.mxu0 %v89
    %v410 = vpop.f32.mrf.mxu0
    %v411 = vadd.f32 %v70, %v410
    %v412 = vpop.f32.mrf.mxu0
    %v413 = vadd.f32 %v74, %v412
    %414 = vmatprep.mubr.f32.mxu0 0.0
    %415 = vmatmul.mubr.f32.gmra.mxu0 %v92
    %v416 = vpop.f32.mrf.mxu0
    %v417 = vadd.f32 %v70, %v416
    %v418 = vpop.f32.mrf.mxu0
    %v419 = vadd.f32 %v74, %v418
    %420 = vmatprep.mubr.f32.mxu0 0.0
    %421 = vmatmul.mubr.f32.gmra.mxu0 %v95
    %v422 = vpop.f32.mrf.mxu0
    %v423 = vadd.f32 %v70, %v422
    %v424 = vpop.f32.mrf.mxu0
    %v425 = vadd.f32 %v74, %v424
    %426 = vmatprep.mubr.f32.mxu0 0.0
    %427 = vmatmul.mubr.f32.gmra.mxu0 %v98
    %v428 = vpop.f32.mrf.mxu0
    %v429 = vadd.f32 %v70, %v428
    %v430 = vpop.f32.mrf.mxu0
    %v431 = vadd.f32 %v74, %v430
    %432 = vmatprep.mubr.f32.mxu0 0.0
    %433 = vmatmul.mubr.f32.gmra.mxu0 %v101
    %v434 = vpop.f32.mrf.mxu0
    %v435 = vadd.f32 %v70, %v434
    %v436 = vpop.f32.mrf.mxu0
    %v437 = vadd.f32 %v74, %v436
    %438 = vmatprep.mubr.f32.mxu0 0.0
    %439 = vmatmul.mubr.f32.gmra.mxu0 %v104
    %v440 = vpop.f32.mrf.mxu0
    %v441 = vadd.f32 %v70, %v440
    %v442 = vpop.f32.mrf.mxu0
    %v443 = vadd.f32 %v74, %v442
    %444 = vdwg.mxu0
    %445 = vst [vmem:[#allocation5] sm:$0xff] %v173
    %446 = vst [vmem:[#allocation5 + $0x8] sm:$0xff] %v175
    %447 = vst [vmem:[#allocation5 + $0x10] sm:$0xff] %v286
    %448 = vst [vmem:[#allocation5 + $0x18] sm:$0xff] %v288
    %449 = vst [vmem:[#allocation5 + $0x20] sm:$0xff] %v399
    %450 = vst [vmem:[#allocation5 + $0x28] sm:$0xff] %v401
    %451 = vst [vmem:[#allocation5 + $0x30] sm:$0xff] %v179
    %452 = vst [vmem:[#allocation5 + $0x38] sm:$0xff] %v181
    %453 = vst [vmem:[#allocation5 + $0x40] sm:$0xff] %v292
    %454 = vst [vmem:[#allocation5 + $0x48] sm:$0xff] %v294
    %455 = vst [vmem:[#allocation5 + $0x50] sm:$0xff] %v405
    %456 = vst [vmem:[#allocation5 + $0x58] sm:$0xff] %v407
    %457 = vst [vmem:[#allocation5 + $0x60] sm:$0xff] %v185
    %458 = vst [vmem:[#allocation5 + $0x68] sm:$0xff] %v187
    %459 = vst [vmem:[#allocation5 + $0x70] sm:$0xff] %v298
    %460 = vst [vmem:[#allocation5 + $0x78] sm:$0xff] %v300
    %461 = vst [vmem:[#allocation5 + $0x80] sm:$0xff] %v411
    %462 = vst [vmem:[#allocation5 + $0x88] sm:$0xff] %v413
    %463 = vst [vmem:[#allocation5 + $0x90] sm:$0xff] %v191
    %464 = vst [vmem:[#allocation5 + $0x98] sm:$0xff] %v193
    %465 = vst [vmem:[#allocation5 + $0xa0] sm:$0xff] %v304
    %466 = vst [vmem:[#allocation5 + $0xa8] sm:$0xff] %v306
    %467 = vst [vmem:[#allocation5 + $0xb0] sm:$0xff] %v417
    %468 = vst [vmem:[#allocation5 + $0xb8] sm:$0xff] %v419
    %469 = vst [vmem:[#allocation5 + $0xc0] sm:$0xff] %v197
    %470 = vst [vmem:[#allocation5 + $0xc8] sm:$0xff] %v199
    %471 = vst [vmem:[#allocation5 + $0xd0] sm:$0xff] %v310
    %472 = vst [vmem:[#allocation5 + $0xd8] sm:$0xff] %v312
    %473 = vst [vmem:[#allocation5 + $0xe0] sm:$0xff] %v423
    %474 = vst [vmem:[#allocation5 + $0xe8] sm:$0xff] %v425
    %475 = vst [vmem:[#allocation5 + $0xf0] sm:$0xff] %v203
    %476 = vst [vmem:[#allocation5 + $0xf8] sm:$0xff] %v205
    %477 = vst [vmem:[#allocation5 + $0x100] sm:$0xff] %v316
    %478 = vst [vmem:[#allocation5 + $0x108] sm:$0xff] %v318
    %479 = vst [vmem:[#allocation5 + $0x110] sm:$0xff] %v429
    %480 = vst [vmem:[#allocation5 + $0x118] sm:$0xff] %v431
    %481 = vst [vmem:[#allocation5 + $0x120] sm:$0xff] %v209
    %482 = vst [vmem:[#allocation5 + $0x128] sm:$0xff] %v211
    %483 = vst [vmem:[#allocation5 + $0x130] sm:$0xff] %v322
    %484 = vst [vmem:[#allocation5 + $0x138] sm:$0xff] %v324
    %485 = vst [vmem:[#allocation5 + $0x140] sm:$0xff] %v435
    %486 = vst [vmem:[#allocation5 + $0x148] sm:$0xff] %v437
    %487 = vst [vmem:[#allocation5 + $0x150] sm:$0xff] %v215
    %488 = vst [vmem:[#allocation5 + $0x158] sm:$0xff] %v217
    %489 = vst [vmem:[#allocation5 + $0x160] sm:$0xff] %v328
    %490 = vst [vmem:[#allocation5 + $0x168] sm:$0xff] %v330
    %491 = vst [vmem:[#allocation5 + $0x170] sm:$0xff] %v441
    %492 = vst [vmem:[#allocation5 + $0x178] sm:$0xff] %v443
    // Predicated region
    $region18: #{tpu_custom_call.1} parent=1 // pred_check
      _
    $region19: #{tpu_custom_call.1} parent=1 // pred_check_branch
      %494 = sbr.rel (0) target = $region21
    $region20: #{tpu_custom_call.1} parent=1 // pred_region
      %s496 = ssub.s32 6144, 6144
      %497 = vsyncadd [#allocation4], %s496
      %s498 = sshll.u32 [#allocation5], 4
      %s499 = int_to_ptr.vmem [resolvable:$true] %s498
      %504 = dma.vmem_to_hbm [thread:$0]  %s499, 6144, %s3, [#allocation4], 768, 768, 48
    $region21: #{tpu_custom_call.1} parent=1 // pred_fallthru
      _
    // Predicated region
    $region22: #{tpu_custom_call.1} parent=1 // pred_check
      _
    $region23: #{tpu_custom_call.1} parent=1 // pred_check_branch
      %506 = sbr.rel (0) target = $region25
    $region24: #{tpu_custom_call.1} parent=1 // pred_region
      %507 = dma.done [#allocation4], 6144
    $region25: #{tpu_custom_call.1} parent=1 // pred_fallthru
      _
    %508 = vsyncpa [#allocation3], 1
    %509 = vsyncpa [#allocation4], 1

</llo_original>
